<compile_context>
chip_gen: v5e
topology: v5e:2x2
jax: 0.10.0
libtpu: 0.0.40
codegen_flags: <defaults>
</compile_context>

<pallas_src>
import jax
import jax.numpy as jnp
from jax.experimental import pallas as pl
from jax.experimental.pallas import tpu as pltpu

_LANE = 128
_MAX_BATCH_FOLD = 16          # cap on samples folded per grid step (unroll bound)


def _round_up(x, m):
    return ((x + m - 1) // m) * m


def _vmem_capacity_bytes():
    """Generation-aware VMEM size; conservative fallback if the query fails."""
    try:
        return int(pltpu.get_tpu_info().vmem_capacity_bytes)
    except Exception:
        return 64 << 20  # v7x has the smallest VMEM -> conservative default


def l1_loss(inputs, targets, fvalid):
    """Pallas TPU equivalent of the PyTorch L1Loss module forward pass."""
    assert inputs.shape == targets.shape
    B = inputs.shape[0]
    assert fvalid.shape == (B,)

    n_per_sample = 1
    for d in inputs.shape[1:]:
        n_per_sample *= d

    dtype = inputs.dtype
    itemsize = jnp.dtype(dtype).itemsize
    packing = max(1, 4 // itemsize)
    min_tile_rows = 8 * packing                 # native sublane tile rows: 8/16/32

    # ---- generation-aware per-input block target (bytes) --------------------
    vmem_cap = _vmem_capacity_bytes()
    target_block_bytes = (8 << 20) if vmem_cap >= (96 << 20) else (4 << 20)

    # ---- lane-dense (B, rows, 128) view; no pad in the common case ----------
    x2 = inputs.reshape(B, n_per_sample)
    y2 = targets.reshape(B, n_per_sample)
    n_pad = _round_up(n_per_sample, _LANE)
    if n_pad != n_per_sample:
        # Rare fallback (C*H*W not a multiple of 128).  Identical zero padding
        # on both operands -> |x - y| == 0 in the padded tail.
        pad = n_pad - n_per_sample
        x2 = jnp.pad(x2, ((0, 0), (0, pad)))
        y2 = jnp.pad(y2, ((0, 0), (0, pad)))
    rows = n_pad // _LANE
    x3 = x2.reshape(B, rows, _LANE)
    y3 = y2.reshape(B, rows, _LANE)

    # ---- tiling --------------------------------------------------------------
    sample_bytes = rows * _LANE * itemsize
    if sample_bytes <= target_block_bytes:
        # Whole sample fits in one block: fold several samples per grid step to
        # amortize the fixed per-step overhead on small workloads.
        block_rows = rows                       # equals full dim -> always legal
        n_blocks = 1
        bb = int(min(B, _MAX_BATCH_FOLD,
                     max(1, target_block_bytes // max(sample_bytes, 1))))
    else:
        bb = 1
        target_rows = target_block_bytes // (_LANE * itemsize)
        block_rows = max(min_tile_rows,
                         (target_rows // min_tile_rows) * min_tile_rows)
        n_blocks = int(pl.cdiv(rows, block_rows))

    grid_b = int(pl.cdiv(B, bb))
    b_pad = grid_b * bb
    # The last rows-block may over-cover; its tail must be masked in-kernel
    # (over-covered VMEM contents are undefined).
    need_mask = (n_blocks > 1) and (rows % block_rows != 0)
    valid_rows_last = rows - (n_blocks - 1) * block_rows

    block_bytes = bb * block_rows * _LANE * itemsize
    # 2 inputs x 2 buffers x block + margin, capped below physical VMEM.
    vmem_limit = max(16 << 20, 4 * block_bytes + (8 << 20))
    vmem_limit = int(min(vmem_limit, vmem_cap - (12 << 20)))

    def kernel(x_ref, y_ref, out_ref):
        # x_ref / y_ref: (bb, block_rows, 128) in the input dtype.
        # out_ref: (bb, 1) f32 partial sums in SMEM.
        for i in range(bb):                     # static, small unroll
            d = jnp.abs(x_ref[i] - y_ref[i])    # (block_rows, 128), input dtype
            if need_mask:
                row = jax.lax.broadcasted_iota(jnp.int32, (block_rows, _LANE), 0)
                limit = jnp.where(pl.program_id(1) == n_blocks - 1,
                                  valid_rows_last, block_rows)
                d = jnp.where(row < limit, d, jnp.zeros_like(d))
            # Staged reduce: sublane reduce accumulated in f32 (keeps bf16
            # blocks from materializing a full f32 temp), then one lane reduce.
            col = jnp.sum(d, axis=0, keepdims=True, dtype=jnp.float32)  # (1,128)
            out_ref[i, 0] = jnp.sum(col)

    cost = pl.CostEstimate(
        flops=2 * B * n_per_sample,
        transcendentals=0,
        bytes_accessed=2 * B * n_per_sample * itemsize + b_pad * n_blocks * 4,
    )

    partial_sums = pl.pallas_call(
        kernel,
        out_shape=jax.ShapeDtypeStruct((b_pad, n_blocks), jnp.float32),
        grid_spec=pltpu.PrefetchScalarGridSpec(
            num_scalar_prefetch=0,
            grid=(grid_b, n_blocks),
            in_specs=[
                pl.BlockSpec((bb, block_rows, _LANE), lambda b, j: (b, j, 0)),
                pl.BlockSpec((bb, block_rows, _LANE), lambda b, j: (b, j, 0)),
            ],
            out_specs=pl.BlockSpec(
                (bb, 1), lambda b, j: (b, j), memory_space=pltpu.SMEM
            ),
        ),
        compiler_params=pltpu.CompilerParams(
            dimension_semantics=("parallel", "parallel"),
            vmem_limit_bytes=vmem_limit,
        ),
        cost_estimate=cost,
    )(x3, y3)

    # Tiny O(B * n_blocks) epilogue: per-sample mean, FVaild scale, batch mean,
    # with both reciprocals folded into one trace-time constant.
    per_sample_sum = jnp.sum(partial_sums[:B], axis=1)                 # (B,)
    scale = 1.0 / (float(n_per_sample) * float(B))
    return jnp.sum(per_sample_sum * fvalid.astype(jnp.float32)) * scale


if __name__ == "__main__":
    # Small deterministic example consistent with the module's forward
    B, C, H, W = 2, 4, 16, 16
    key = jax.random.PRNGKey(0)
    k1, k2, k3 = jax.random.split(key, 3)

    inputs = jax.random.normal(k1, (B, C, H, W), dtype=jnp.float32)
    targets = jax.random.normal(k2, (B, C, H, W), dtype=jnp.float32)
    fvalid = jax.random.uniform(k3, (B,), dtype=jnp.float32)

    loss = l1_loss(inputs, targets, fvalid)
    jax.block_until_ready(loss)

    # reference check (plain JAX)
    ref = jnp.mean(jnp.mean(jnp.abs(inputs - targets), axis=(1, 2, 3)) * fvalid)
    assert jnp.allclose(loss, ref, rtol=1e-5, atol=1e-6), (loss, ref)

    print("KERNEL_OK")
</pallas_src>

<mosaic_0001>
module attributes {stable_mosaic.version = 11 : i64} {
  func.func @kernel(%arg0: i32, %arg1: i32, %arg2: memref<2x8x128xf32, #tpu.memory_space<vmem>>, %arg3: memref<2x8x128xf32, #tpu.memory_space<vmem>>, %arg4: memref<2x1xf32, #tpu.memory_space<smem>>) attributes {dimension_semantics = [#tpu.dimension_semantics<parallel>, #tpu.dimension_semantics<parallel>], iteration_bounds = array<i64: 1, 1>, scalar_prefetch = 0 : i64, scratch_operands = 0 : i64, tpu.core_type = #tpu.core_type<tc>, window_params = [{transform_indices = @transform_0, window_bounds = array<i64: 2, 8, 128>}, {transform_indices = @transform_1, window_bounds = array<i64: 2, 8, 128>}, {transform_indices = @transform_2, window_bounds = array<i64: 2, 1>}]} {
    %c0 = arith.constant 0 : index
    %c0_0 = arith.constant 0 : index
    %c0_1 = arith.constant 0 : index
    %0 = vector.load %arg2[%c0, %c0_0, %c0_1] : memref<2x8x128xf32, #tpu.memory_space<vmem>>, vector<1x8x128xf32>
    %1 = vector.shape_cast %0 : vector<1x8x128xf32> to vector<8x128xf32>
    %c0_2 = arith.constant 0 : index
    %c0_3 = arith.constant 0 : index
    %c0_4 = arith.constant 0 : index
    %2 = vector.load %arg3[%c0_2, %c0_3, %c0_4] : memref<2x8x128xf32, #tpu.memory_space<vmem>>, vector<1x8x128xf32>
    %3 = vector.shape_cast %2 : vector<1x8x128xf32> to vector<8x128xf32>
    %4 = arith.subf %1, %3 : vector<8x128xf32>
    %5 = math.absf %4 : vector<8x128xf32>
    %cst = arith.constant dense<0.000000e+00> : vector<128xf32>
    %6 = vector.multi_reduction <add>, %5, %cst [0] : vector<8x128xf32> to vector<128xf32>
    %7 = vector.shape_cast %6 : vector<128xf32> to vector<1x128xf32>
    %8 = vector.shape_cast %7 : vector<1x128xf32> to vector<1x1x128xf32>
    %cst_5 = arith.constant dense<0.000000e+00> : vector<1xf32>
    %9 = vector.multi_reduction <add>, %8, %cst_5 [1, 2] : vector<1x1x128xf32> to vector<1xf32>
    %10 = vector.shape_cast %9 : vector<1xf32> to vector<1x1x1xf32>
    %11 = vector.extract %10[0, 0, 0] : f32 from vector<1x1x1xf32>
    %c0_6 = arith.constant 0 : index
    %c0_7 = arith.constant 0 : index
    %12 = memref.load %arg4[%c0_6, %c0_7] : memref<2x1xf32, #tpu.memory_space<smem>>
    memref.store %11, %arg4[%c0_6, %c0_7] : memref<2x1xf32, #tpu.memory_space<smem>>
    %c1 = arith.constant 1 : index
    %c0_8 = arith.constant 0 : index
    %c0_9 = arith.constant 0 : index
    %13 = vector.load %arg2[%c1, %c0_8, %c0_9] : memref<2x8x128xf32, #tpu.memory_space<vmem>>, vector<1x8x128xf32>
    %14 = vector.shape_cast %13 : vector<1x8x128xf32> to vector<8x128xf32>
    %c1_10 = arith.constant 1 : index
    %c0_11 = arith.constant 0 : index
    %c0_12 = arith.constant 0 : index
    %15 = vector.load %arg3[%c1_10, %c0_11, %c0_12] : memref<2x8x128xf32, #tpu.memory_space<vmem>>, vector<1x8x128xf32>
    %16 = vector.shape_cast %15 : vector<1x8x128xf32> to vector<8x128xf32>
    %17 = arith.subf %14, %16 : vector<8x128xf32>
    %18 = math.absf %17 : vector<8x128xf32>
    %cst_13 = arith.constant dense<0.000000e+00> : vector<128xf32>
    %19 = vector.multi_reduction <add>, %18, %cst_13 [0] : vector<8x128xf32> to vector<128xf32>
    %20 = vector.shape_cast %19 : vector<128xf32> to vector<1x128xf32>
    %21 = vector.shape_cast %20 : vector<1x128xf32> to vector<1x1x128xf32>
    %cst_14 = arith.constant dense<0.000000e+00> : vector<1xf32>
    %22 = vector.multi_reduction <add>, %21, %cst_14 [1, 2] : vector<1x1x128xf32> to vector<1xf32>
    %23 = vector.shape_cast %22 : vector<1xf32> to vector<1x1x1xf32>
    %24 = vector.extract %23[0, 0, 0] : f32 from vector<1x1x1xf32>
    %c1_15 = arith.constant 1 : index
    %c0_16 = arith.constant 0 : index
    %25 = memref.load %arg4[%c1_15, %c0_16] : memref<2x1xf32, #tpu.memory_space<smem>>
    memref.store %24, %arg4[%c1_15, %c0_16] : memref<2x1xf32, #tpu.memory_space<smem>>
    return
  }
  func.func @transform_0(%arg0: i32, %arg1: i32) -> (i32, i32, i32) {
    %c0_i32 = arith.constant 0 : i32
    %c0_i32_0 = arith.constant 0 : i32
    return %arg0, %arg1, %c0_i32 : i32, i32, i32
  }
  func.func @transform_1(%arg0: i32, %arg1: i32) -> (i32, i32, i32) {
    %c0_i32 = arith.constant 0 : i32
    %c0_i32_0 = arith.constant 0 : i32
    return %arg0, %arg1, %c0_i32 : i32, i32, i32
  }
  func.func @transform_2(%arg0: i32, %arg1: i32) -> (i32, i32) {
    %c0_i32 = arith.constant 0 : i32
    return %arg0, %arg1 : i32, i32
  }
}

</mosaic_0001>

<llo_original>
// kernel: tpu_custom_call.1
$region0: #{tpu_custom_call.1}
  #allocation0 [shape = 'u32[]', space=smem, size = 0x4, offset = 0x4, fixed_abs, tag = 'smem constant byte address 0x4 - core index']
  #allocation1 [shape = 'u32[72,128]{1,0:T(1,128)}', space=vmem, size = 0x9000, scoped, tag = 'internal scratch']
  %s0 = inlined_call_operand.hbm [shape: f32[2,8,128], index: 0, kind: input, shape index: {}]
  %s1 = inlined_call_operand.hbm [shape: f32[2,8,128], index: 1, kind: input, shape index: {}]
  %s2 = inlined_call_operand.vmem [shape: f32[2,1], index: 2, kind: output, shape index: {}]
  %s3 = sld [smem:[#allocation0]]
  $region26: #{tpu_custom_call.1} parent=0
    _
  %s5 = ssub.s32 1, %s3
  %s6 = scalar_select 0, %s5, %s3
  $region1: #{tpu_custom_call.1} parent=0
    #allocation2 [shape = 'u8[8192]{0}', space=vmem, size = 0x2000, scoped, tag = 'input window, operand 0, single buffered']
    #allocation3 [shape = 's32[1]{0}', space=sflag, size = 0x4, scoped, tag = 'scoped memory for tpu_custom_call.1']
    #allocation4 [shape = 's32[1]{0}', space=sflag, size = 0x4, scoped, tag = 'scoped memory for tpu_custom_call.1']
    #allocation5 [shape = 'u8[8192]{0}', space=vmem, size = 0x2000, scoped, tag = 'input window, operand 1, single buffered']
    #allocation6 [shape = 's32[1]{0}', space=sflag, size = 0x4, scoped, tag = 'scoped memory for tpu_custom_call.1']
    #allocation7 [shape = 'u8[1024]{0}', space=smem, size = 0x400, scoped, tag = 'output window, operand 0, single buffered']
    %7 = vsyncpa [#allocation3], 0
    %8 = vsyncpa [#allocation6], 0
    %9 = vsyncpa [#allocation4], 0
    // Predicated region
    $region2: #{tpu_custom_call.1} parent=1 // pred_check
      _
    $region3: #{tpu_custom_call.1} parent=1 // pred_check_branch
      %11 = sbr.rel (0) target = $region5
    $region4: #{tpu_custom_call.1} parent=1 // pred_region
      %13 = vsyncadd [#allocation3], 0
      %s14 = sshll.u32 %s0, 4
      %s15 = int_to_ptr.hbm [resolvable:$true] %s14
      %s16 = sshll.u32 [#allocation2], 4
      %s17 = int_to_ptr.vmem [resolvable:$true] %s16
      %22 = dma.hbm_to_vmem [thread:$0]  %s15, 256, %s17, [#allocation3], 128, 128, 8
    $region5: #{tpu_custom_call.1} parent=1 // pred_fallthru
      _
    // Predicated region
    $region6: #{tpu_custom_call.1} parent=1 // pred_check
      _
    $region7: #{tpu_custom_call.1} parent=1 // pred_check_branch
      %24 = sbr.rel (0) target = $region9
    $region8: #{tpu_custom_call.1} parent=1 // pred_region
      %26 = vsyncadd [#allocation6], 0
      %s27 = sshll.u32 %s1, 4
      %s28 = int_to_ptr.hbm [resolvable:$true] %s27
      %s29 = sshll.u32 [#allocation5], 4
      %s30 = int_to_ptr.vmem [resolvable:$true] %s29
      %35 = dma.hbm_to_vmem [thread:$0]  %s28, 256, %s30, [#allocation6], 128, 128, 8
    $region9: #{tpu_custom_call.1} parent=1 // pred_fallthru
      _
    // Predicated region
    $region10: #{tpu_custom_call.1} parent=1 // pred_check
      _
    $region11: #{tpu_custom_call.1} parent=1 // pred_check_branch
      %37 = sbr.rel (0) target = $region13
    $region12: #{tpu_custom_call.1} parent=1 // pred_region
      %39 = dma.done [#allocation3], 256
    $region13: #{tpu_custom_call.1} parent=1 // pred_fallthru
      _
    // Predicated region
    $region14: #{tpu_custom_call.1} parent=1 // pred_check
      _
    $region15: #{tpu_custom_call.1} parent=1 // pred_check_branch
      %41 = sbr.rel (0) target = $region17
    $region16: #{tpu_custom_call.1} parent=1 // pred_region
      %43 = dma.done [#allocation6], 256
    $region17: #{tpu_custom_call.1} parent=1 // pred_fallthru
      _
    %v44 = vld [vmem:[#allocation2] sm:$0xff]
    %v45 = vld [vmem:[#allocation5] sm:$0xff]
    %v46 = vsub.f32 %v44, %v45
    %v47 = vand.u32 2147483647, %v46
    %v48 = vrot.slane %v47, 4
    %v49 = vadd.f32 %v47, %v48
    %v50 = vrot.slane %v49, 2
    %v51 = vadd.f32 %v49, %v50
    %v52 = vrot.slane %v51, 1
    %v53 = vadd.f32 %v51, %v52
    %vm54 = vcmask 1040384
    %v55 = vsel %vm54, %v53, 0.0
    %56 = vadd.xlane.f32.xlu0 %v55
    %v57 = vpop.xlane.xlu0 %56
    %v58 = vrot.slane %v57, 4
    %v59 = vadd.f32 %v57, %v58
    %v60 = vrot.slane %v59, 2
    %v61 = vadd.f32 %v59, %v60
    %v62 = vrot.slane %v61, 1
    %v63 = vadd.f32 %v61, %v62
    %s64 = vtos %v63
    %s65 = scalar_lea.smem [#allocation7], 0
    %66 = sst [smem:[%s65]] %s64
    %s67 = scalar_lea.vmem [#allocation2], 8
    %v68 = vld [vmem:[%s67] sm:$0xff]
    %s69 = scalar_lea.vmem [#allocation5], 8
    %v70 = vld [vmem:[%s69] sm:$0xff]
    %v71 = vsub.f32 %v68, %v70
    %v72 = vand.u32 2147483647, %v71
    %v73 = vrot.slane %v72, 4
    %v74 = vadd.f32 %v72, %v73
    %v75 = vrot.slane %v74, 2
    %v76 = vadd.f32 %v74, %v75
    %v77 = vrot.slane %v76, 1
    %v78 = vadd.f32 %v76, %v77
    %v79 = vsel %vm54, %v78, 0.0
    %80 = vadd.xlane.f32.xlu0 %v79
    %v81 = vpop.xlane.xlu0 %80
    %v82 = vrot.slane %v81, 4
    %v83 = vadd.f32 %v81, %v82
    %v84 = vrot.slane %v83, 2
    %v85 = vadd.f32 %v83, %v84
    %v86 = vrot.slane %v85, 1
    %v87 = vadd.f32 %v85, %v86
    %s88 = vtos %v87
    %s89 = scalar_lea.smem [#allocation7], 128
    %90 = sst [smem:[%s89]] %s88
    // Predicated region
    $region18: #{tpu_custom_call.1} parent=1 // pred_check
      _
    $region19: #{tpu_custom_call.1} parent=1 // pred_check_branch
      %92 = sbr.rel (0) target = $region21
    $region20: #{tpu_custom_call.1} parent=1 // pred_region
      %94 = vsyncadd [#allocation4], 0
      %s96 = sshll.u32 %s2, 4
      %s97 = int_to_ptr.vmem [resolvable:$true] %s96
      %99 = dma.smem_to_vmem [#allocation7], 32, %s97, [#allocation4]
    $region21: #{tpu_custom_call.1} parent=1 // pred_fallthru
      _
    // Predicated region
    $region22: #{tpu_custom_call.1} parent=1 // pred_check
      _
    $region23: #{tpu_custom_call.1} parent=1 // pred_check_branch
      %101 = sbr.rel (0) target = $region25
    $region24: #{tpu_custom_call.1} parent=1 // pred_region
      %103 = dma.done [#allocation4], 32
    $region25: #{tpu_custom_call.1} parent=1 // pred_fallthru
      _
    %104 = sfence
    %105 = vsyncpa [#allocation3], 1
    %106 = vsyncpa [#allocation6], 1
    %107 = vsyncpa [#allocation4], 1

</llo_original>
